<compile_context>
chip_gen: v5e
topology: v5e:2x2
jax: 0.10.0
libtpu: 0.0.40
codegen_flags: <defaults>
</compile_context>

<pallas_src>
import functools

import jax
import jax.numpy as jnp
from jax import lax
from jax.experimental import pallas as pl
from jax.experimental.pallas import tpu as pltpu


def _dropblock_mask_kernel(u_pad_ref, bm_ref, *, gamma, block_size, h, w):
    """block_mask = 1 - dilate(uniform < gamma) with a (bs x bs) window.

    u_pad_ref: (C_mask, H+2p, W+2p) uniform noise padded with +inf
    bm_ref   : (C_mask, H, W) float32, 1.0 = keep, 0.0 = drop
    """
    u = u_pad_ref[...].astype(jnp.float32)
    seed = (u < gamma).astype(jnp.float32)        # 1 where a drop-block is seeded
    # Separable max-dilation (== max_pool2d, stride 1, pad bs//2): first along
    # W, then along H.  Padded border is +inf noise -> seed 0 there, which
    # matches max_pool2d's implicit -inf padding for a {0,1} mask.
    rowmax = seed[:, :, 0:w]
    for dj in range(1, block_size):
        rowmax = jnp.maximum(rowmax, seed[:, :, dj:dj + w])
    dil = rowmax[:, 0:h, :]
    for di in range(1, block_size):
        dil = jnp.maximum(dil, rowmax[:, di:di + h, :])
    bm_ref[...] = 1.0 - dil


def _dropblock_apply_kernel(x_ref, bm_ref, o_ref, *, numel):
    """out = x * block_mask * (numel / keeped); mask broadcast over batch."""
    bm = bm_ref[...].astype(jnp.float32)          # (C_mask, HW), grid-resident
    keeped = jnp.sum(bm)                          # exact: bm is {0,1} in f32
    scale = numel / keeped                        # one scalar divide
    bm_scaled = bm * scale                        # small multiply, hoisted off x
    x = x_ref[...].astype(jnp.float32)            # (nb, C, HW), lane-dense
    o_ref[...] = (x * bm_scaled[None, :, :]).astype(o_ref.dtype)


def dropblock2d(x, noise, drop_prob, block_size, *, share_channel=False,
                training=True):
    """Functional DropBlock2D forward.

    x     : (N, C, H, W)
    noise : uniform[0,1) samples of shape (C, H, W) (or (H, W) if
            share_channel).  torch samples these inside forward(); they are an
            explicit input here so the op is deterministic and testable.
            # TODO(synk): optionally generate the noise in-kernel with
            # pltpu.prng_seed / pltpu.prng_random_bits instead.
    """
    if (not training) or float(drop_prob) == 0.0:
        return x
    # TODO(synk): the drop_prob warm-up schedule (step()/reset_steps and the
    # `i` counter buffers) is host-side training-loop state, not kernel work.

    n, c, h, w = x.shape
    bs = int(block_size)
    assert bs % 2 == 1, "block_size must be odd (torch shape contract)"
    p = bs // 2
    gamma = float(drop_prob) / (bs * bs) * (h * w) / ((w - bs + 1) * (h - bs + 1))

    c_mask = 1 if share_channel else c
    u = jnp.asarray(noise, jnp.float32).reshape(c_mask, h, w)
    # +inf padding: padded cells can never seed a drop (== max_pool2d padding).
    u_pad = jnp.pad(u, ((0, 0), (p, p), (p, p)), constant_values=jnp.inf)

    # ---- Stage 1: tiny, batch-independent block-mask kernel -----------------
    bm = pl.pallas_call(
        functools.partial(_dropblock_mask_kernel,
                          gamma=gamma, block_size=bs, h=h, w=w),
        out_shape=jax.ShapeDtypeStruct((c_mask, h, w), jnp.float32),
        grid=(1,),
        in_specs=[pl.BlockSpec((c_mask, h + 2 * p, w + 2 * p),
                               lambda i: (0, 0, 0))],
        out_specs=pl.BlockSpec((c_mask, h, w), lambda i: (0, 0, 0)),
    )(u_pad)

    # ---- Stage 2: lane-dense elementwise apply over x (the big pass) --------
    hw = h * w
    x3 = x.reshape(n, c, hw)          # free contiguous reshape (no transpose)
    bm2 = bm.reshape(c_mask, hw)      # free contiguous reshape
    numel = float(c_mask * h * w)     # block_mask.numel() in torch

    itemsize = jnp.dtype(x.dtype).itemsize
    row_bytes = max(1, c * hw * itemsize)
    vmem_budget = 4 * 1024 * 1024     # per buffer; x (in+out) double-buffered
    nb = int(max(1, min(n, vmem_budget // row_bytes)))
    grid = (pl.cdiv(n, nb),)

    out3 = pl.pallas_call(
        functools.partial(_dropblock_apply_kernel, numel=numel),
        out_shape=jax.ShapeDtypeStruct((n, c, hw), x.dtype),
        grid=grid,
        in_specs=[
            pl.BlockSpec((nb, c, hw), lambda b: (b, 0, 0)),
            pl.BlockSpec((c_mask, hw), lambda b: (0, 0)),   # resident
        ],
        out_specs=pl.BlockSpec((nb, c, hw), lambda b: (b, 0, 0)),
        compiler_params=pltpu.CompilerParams(
            dimension_semantics=("parallel",)),
    )(x3, bm2)
    return out3.reshape(n, c, h, w)


def _dropblock_ref(x, noise, drop_prob, block_size, share_channel=False):
    """Pure-JAX reference (same pre-sampled noise)."""
    n, c, h, w = x.shape
    bs = int(block_size)
    p = bs // 2
    gamma = float(drop_prob) / (bs * bs) * (h * w) / ((w - bs + 1) * (h - bs + 1))
    c_mask = 1 if share_channel else c
    u = jnp.asarray(noise, jnp.float32).reshape(c_mask, h, w)
    seed = (u < gamma).astype(jnp.float32)
    dil = lax.reduce_window(seed, -jnp.inf, lax.max,
                            (1, bs, bs), (1, 1, 1),
                            ((0, 0), (p, p), (p, p)))
    block_mask = 1.0 - dil
    keeped = jnp.sum(block_mask)
    scale = block_mask.size / keeped
    return (x * block_mask[None].astype(x.dtype)) * scale.astype(x.dtype)


if __name__ == "__main__":
    key = jax.random.PRNGKey(0)
    kx, kn = jax.random.split(key)

    batch, channels, height, width = 2, 4, 16, 16
    drop_prob, block_size = 0.1, 3

    x = jax.random.normal(kx, (batch, channels, height, width), jnp.float32)
    noise = jax.random.uniform(kn, (channels, height, width), jnp.float32)

    # per-channel mask path (share_channel=False, the module default)
    out = jax.block_until_ready(
        dropblock2d(x, noise, drop_prob, block_size,
                    share_channel=False, training=True))
    ref = _dropblock_ref(x, noise, drop_prob, block_size, share_channel=False)
    assert out.shape == x.shape
    assert jnp.allclose(out, ref, atol=1e-5, rtol=1e-5)

    # shared-channel mask path
    noise_sc = jax.random.uniform(kn, (height, width), jnp.float32)
    out_sc = jax.block_until_ready(
        dropblock2d(x, noise_sc, drop_prob, block_size,
                    share_channel=True, training=True))
    ref_sc = _dropblock_ref(x, noise_sc, drop_prob, block_size,
                            share_channel=True)
    assert jnp.allclose(out_sc, ref_sc, atol=1e-5, rtol=1e-5)

    # eval / drop_prob == 0 -> identity (host-side branch, like torch .item())
    assert dropblock2d(x, noise, 0.0, block_size, training=True) is x
    assert dropblock2d(x, noise, drop_prob, block_size, training=False) is x

    print("KERNEL_OK")
</pallas_src>

<mosaic_0001>
module attributes {stable_mosaic.version = 11 : i64} {
  func.func @_dropblock_mask_kernel(%arg0: i32, %arg1: memref<4x18x18xf32, #tpu.memory_space<vmem>>, %arg2: memref<4x16x16xf32, #tpu.memory_space<vmem>>) attributes {dimension_semantics = [#tpu.dimension_semantics<arbitrary>], iteration_bounds = array<i64: 1>, scalar_prefetch = 0 : i64, scratch_operands = 0 : i64, tpu.core_type = #tpu.core_type<tc>, window_params = [{pipeline_mode = #tpu.pipeline_mode<synchronous>, transform_indices = @transform_0, window_bounds = array<i64: 4, 18, 18>}, {pipeline_mode = #tpu.pipeline_mode<synchronous>, transform_indices = @transform_1, window_bounds = array<i64: 4, 16, 16>}]} {
    %c0 = arith.constant 0 : index
    %c0_0 = arith.constant 0 : index
    %c0_1 = arith.constant 0 : index
    %0 = vector.load %arg1[%c0, %c0_0, %c0_1] : memref<4x18x18xf32, #tpu.memory_space<vmem>>, vector<4x18x18xf32>
    %cst = arith.constant 0.0145124719 : f32
    %1 = vector.broadcast %cst : f32 to vector<4x18x18xf32>
    %2 = arith.cmpf olt, %0, %1 : vector<4x18x18xf32>
    %3 = arith.extui %2 : vector<4x18x18xi1> to vector<4x18x18xi32>
    %4 = arith.sitofp %3 : vector<4x18x18xi32> to vector<4x18x18xf32>
    %5 = vector.extract_strided_slice %4 {offsets = [0, 0, 0], sizes = [4, 18, 16], strides = [1, 1, 1]} : vector<4x18x18xf32> to vector<4x18x16xf32>
    %6 = vector.extract_strided_slice %4 {offsets = [0, 0, 1], sizes = [4, 18, 16], strides = [1, 1, 1]} : vector<4x18x18xf32> to vector<4x18x16xf32>
    %7 = arith.maximumf %5, %6 : vector<4x18x16xf32>
    %8 = vector.extract_strided_slice %4 {offsets = [0, 0, 2], sizes = [4, 18, 16], strides = [1, 1, 1]} : vector<4x18x18xf32> to vector<4x18x16xf32>
    %9 = arith.maximumf %7, %8 : vector<4x18x16xf32>
    %10 = vector.extract_strided_slice %9 {offsets = [0, 0, 0], sizes = [4, 16, 16], strides = [1, 1, 1]} : vector<4x18x16xf32> to vector<4x16x16xf32>
    %11 = vector.extract_strided_slice %9 {offsets = [0, 1, 0], sizes = [4, 16, 16], strides = [1, 1, 1]} : vector<4x18x16xf32> to vector<4x16x16xf32>
    %12 = arith.maximumf %10, %11 : vector<4x16x16xf32>
    %13 = vector.extract_strided_slice %9 {offsets = [0, 2, 0], sizes = [4, 16, 16], strides = [1, 1, 1]} : vector<4x18x16xf32> to vector<4x16x16xf32>
    %14 = arith.maximumf %12, %13 : vector<4x16x16xf32>
    %cst_2 = arith.constant 1.000000e+00 : f32
    %15 = vector.broadcast %cst_2 : f32 to vector<4x16x16xf32>
    %16 = arith.subf %15, %14 : vector<4x16x16xf32>
    %c0_3 = arith.constant 0 : index
    %c0_4 = arith.constant 0 : index
    %c0_5 = arith.constant 0 : index
    %17 = vector.load %arg2[%c0_3, %c0_4, %c0_5] : memref<4x16x16xf32, #tpu.memory_space<vmem>>, vector<4x16x16xf32>
    tpu.vector_store %arg2[%c0_3, %c0_4, %c0_5], %16 {strides = array<i32>} : memref<4x16x16xf32, #tpu.memory_space<vmem>>, vector<4x16x16xf32>,
    return
  }
  func.func @transform_0(%arg0: i32) -> (i32, i32, i32) {
    %c0_i32 = arith.constant 0 : i32
    %c0_i32_0 = arith.constant 0 : i32
    %c0_i32_1 = arith.constant 0 : i32
    %c0_i32_2 = arith.constant 0 : i32
    return %c0_i32, %c0_i32_0, %c0_i32_1 : i32, i32, i32
  }
  func.func @transform_1(%arg0: i32) -> (i32, i32, i32) {
    %c0_i32 = arith.constant 0 : i32
    %c0_i32_0 = arith.constant 0 : i32
    %c0_i32_1 = arith.constant 0 : i32
    %c0_i32_2 = arith.constant 0 : i32
    return %c0_i32, %c0_i32_0, %c0_i32_1 : i32, i32, i32
  }
}

</mosaic_0001>

<llo_original>
// kernel: tpu_custom_call.1
$region0: #{tpu_custom_call.1}
  #allocation0 [shape = 'u32[]', space=smem, size = 0x4, offset = 0x4, fixed_abs, tag = 'smem constant byte address 0x4 - core index']
  #allocation1 [shape = 'u32[72,128]{1,0:T(1,128)}', space=vmem, size = 0x9000, scoped, tag = 'internal scratch']
  %s0 = inlined_call_operand.vmem [shape: f32[4,18,18], index: 0, kind: input, shape index: {}]
  %s1 = inlined_call_operand.hbm [shape: f32[4,16,16], index: 1, kind: output, shape index: {}]
  %s2 = sld [smem:[#allocation0]]
  $region14: #{tpu_custom_call.1} parent=0
    _
  %s4 = ssub.s32 1, %s2
  %s5 = scalar_select 0, %s4, %s2
  $region1: #{tpu_custom_call.1} parent=0
    #allocation2 [shape = 'u8[32768]{0}', space=vmem, size = 0x8000, scoped, tag = 'output window, operand 0, single buffered']
    #allocation3 [shape = 's32[1]{0}', space=sflag, size = 0x4, scoped, tag = 'scoped memory for tpu_custom_call.1']
    %6 = vsyncpa [#allocation3], 0
    // Predicated region
    $region2: #{tpu_custom_call.1} parent=1 // pred_check
      _
    $region3: #{tpu_custom_call.1} parent=1 // pred_check_branch
      %8 = sbr.rel (0) target = $region5
    $region4: #{tpu_custom_call.1} parent=1 // pred_region
      _
    $region5: #{tpu_custom_call.1} parent=1 // pred_fallthru
      _
    %v9 = vld [vmem:[%s0] sm:$0xff]
    %v10 = vld [vmem:[%s0 + $0x8] sm:$0xff]
    %v11 = vld [vmem:[%s0 + $0x10] sm:$0x3]
    %v12 = vld [vmem:[%s0 + $0x18] sm:$0xff]
    %v13 = vld [vmem:[%s0 + $0x20] sm:$0xff]
    %v14 = vld [vmem:[%s0 + $0x28] sm:$0x3]
    %v15 = vld [vmem:[%s0 + $0x30] sm:$0xff]
    %v16 = vld [vmem:[%s0 + $0x38] sm:$0xff]
    %v17 = vld [vmem:[%s0 + $0x40] sm:$0x3]
    %v18 = vld [vmem:[%s0 + $0x48] sm:$0xff]
    %v19 = vld [vmem:[%s0 + $0x50] sm:$0xff]
    %v20 = vld [vmem:[%s0 + $0x58] sm:$0x3]
    %vm21 = vcmp.lt.f32.partialorder %v9, 0.014512472
    %vm22 = vcmp.lt.f32.partialorder %v10, 0.014512472
    %vm23 = vcmp.lt.f32.partialorder %v11, 0.014512472
    %vm24 = vcmp.lt.f32.partialorder %v12, 0.014512472
    %vm25 = vcmp.lt.f32.partialorder %v13, 0.014512472
    %vm26 = vcmp.lt.f32.partialorder %v14, 0.014512472
    %vm27 = vcmp.lt.f32.partialorder %v15, 0.014512472
    %vm28 = vcmp.lt.f32.partialorder %v16, 0.014512472
    %vm29 = vcmp.lt.f32.partialorder %v17, 0.014512472
    %vm30 = vcmp.lt.f32.partialorder %v18, 0.014512472
    %vm31 = vcmp.lt.f32.partialorder %v19, 0.014512472
    %vm32 = vcmp.lt.f32.partialorder %v20, 0.014512472
    %v33 = vsel %vm21, 1, 0
    %v34 = vsel %vm22, 1, 0
    %v35 = vsel %vm23, 1, 0
    %v36 = vsel %vm24, 1, 0
    %v37 = vsel %vm25, 1, 0
    %v38 = vsel %vm26, 1, 0
    %v39 = vsel %vm27, 1, 0
    %v40 = vsel %vm28, 1, 0
    %v41 = vsel %vm29, 1, 0
    %v42 = vsel %vm30, 1, 0
    %v43 = vsel %vm31, 1, 0
    %v44 = vsel %vm32, 1, 0
    %v45 = vcvt.s32.f32 %v33
    %v46 = vcvt.s32.f32 %v34
    %v47 = vcvt.s32.f32 %v35
    %v48 = vcvt.s32.f32 %v36
    %v49 = vcvt.s32.f32 %v37
    %v50 = vcvt.s32.f32 %v38
    %v51 = vcvt.s32.f32 %v39
    %v52 = vcvt.s32.f32 %v40
    %v53 = vcvt.s32.f32 %v41
    %v54 = vcvt.s32.f32 %v42
    %v55 = vcvt.s32.f32 %v43
    %v56 = vcvt.s32.f32 %v44
    %69 = vrot.lane.b32.xlu0 %v45, 127
    %v70 = vpop.permute.xlu0 %69
    %71 = vrot.lane.b32.xlu0 %v46, 127
    %v72 = vpop.permute.xlu0 %71
    %73 = vrot.lane.b32.xlu0 %v47, 127
    %v74 = vpop.permute.xlu0 %73
    %75 = vrot.lane.b32.xlu0 %v48, 127
    %v76 = vpop.permute.xlu0 %75
    %77 = vrot.lane.b32.xlu0 %v49, 127
    %v78 = vpop.permute.xlu0 %77
    %79 = vrot.lane.b32.xlu0 %v50, 127
    %v80 = vpop.permute.xlu0 %79
    %81 = vrot.lane.b32.xlu0 %v51, 127
    %v82 = vpop.permute.xlu0 %81
    %83 = vrot.lane.b32.xlu0 %v52, 127
    %v84 = vpop.permute.xlu0 %83
    %85 = vrot.lane.b32.xlu0 %v53, 127
    %v86 = vpop.permute.xlu0 %85
    %87 = vrot.lane.b32.xlu0 %v54, 127
    %v88 = vpop.permute.xlu0 %87
    %89 = vrot.lane.b32.xlu0 %v55, 127
    %v90 = vpop.permute.xlu0 %89
    %91 = vrot.lane.b32.xlu0 %v56, 127
    %v92 = vpop.permute.xlu0 %91
    %v105 = vmax.f32 %v45, %v70
    %v106 = vmax.f32 %v46, %v72
    %v107 = vmax.f32 %v47, %v74
    %v108 = vmax.f32 %v48, %v76
    %v109 = vmax.f32 %v49, %v78
    %v110 = vmax.f32 %v50, %v80
    %v111 = vmax.f32 %v51, %v82
    %v112 = vmax.f32 %v52, %v84
    %v113 = vmax.f32 %v53, %v86
    %v114 = vmax.f32 %v54, %v88
    %v115 = vmax.f32 %v55, %v90
    %v116 = vmax.f32 %v56, %v92
    %117 = vrot.lane.b32.xlu0 %v45, 126
    %v118 = vpop.permute.xlu0 %117
    %119 = vrot.lane.b32.xlu0 %v46, 126
    %v120 = vpop.permute.xlu0 %119
    %121 = vrot.lane.b32.xlu0 %v47, 126
    %v122 = vpop.permute.xlu0 %121
    %123 = vrot.lane.b32.xlu0 %v48, 126
    %v124 = vpop.permute.xlu0 %123
    %125 = vrot.lane.b32.xlu0 %v49, 126
    %v126 = vpop.permute.xlu0 %125
    %127 = vrot.lane.b32.xlu0 %v50, 126
    %v128 = vpop.permute.xlu0 %127
    %129 = vrot.lane.b32.xlu0 %v51, 126
    %v130 = vpop.permute.xlu0 %129
    %131 = vrot.lane.b32.xlu0 %v52, 126
    %v132 = vpop.permute.xlu0 %131
    %133 = vrot.lane.b32.xlu0 %v53, 126
    %v134 = vpop.permute.xlu0 %133
    %135 = vrot.lane.b32.xlu0 %v54, 126
    %v136 = vpop.permute.xlu0 %135
    %137 = vrot.lane.b32.xlu0 %v55, 126
    %v138 = vpop.permute.xlu0 %137
    %139 = vrot.lane.b32.xlu0 %v56, 126
    %v140 = vpop.permute.xlu0 %139
    %v153 = vmax.f32 %v105, %v118
    %v154 = vmax.f32 %v106, %v120
    %v155 = vmax.f32 %v107, %v122
    %v156 = vmax.f32 %v108, %v124
    %v157 = vmax.f32 %v109, %v126
    %v158 = vmax.f32 %v110, %v128
    %v159 = vmax.f32 %v111, %v130
    %v160 = vmax.f32 %v112, %v132
    %v161 = vmax.f32 %v113, %v134
    %v162 = vmax.f32 %v114, %v136
    %v163 = vmax.f32 %v115, %v138
    %v164 = vmax.f32 %v116, %v140
    %vm177 = vcmask 1046528
    %v178 = vrot.slane %v153, 1
    %v179 = vrot.slane %v154, 1
    %v180 = vsel %vm177, %v178, %v179
    %v181 = vrot.slane %v155, 1
    %v182 = vsel %vm177, %v179, %v181
    %v183 = vrot.slane %v156, 1
    %v184 = vrot.slane %v157, 1
    %v185 = vsel %vm177, %v183, %v184
    %v186 = vrot.slane %v158, 1
    %v187 = vsel %vm177, %v184, %v186
    %v188 = vrot.slane %v159, 1
    %v189 = vrot.slane %v160, 1
    %v190 = vsel %vm177, %v188, %v189
    %v191 = vrot.slane %v161, 1
    %v192 = vsel %vm177, %v189, %v191
    %v193 = vrot.slane %v162, 1
    %v194 = vrot.slane %v163, 1
    %v195 = vsel %vm177, %v193, %v194
    %v196 = vrot.slane %v164, 1
    %v197 = vsel %vm177, %v194, %v196
    %v206 = vmax.f32 %v153, %v180
    %v207 = vmax.f32 %v154, %v182
    %v208 = vmax.f32 %v156, %v185
    %v209 = vmax.f32 %v157, %v187
    %v210 = vmax.f32 %v159, %v190
    %v211 = vmax.f32 %v160, %v192
    %v212 = vmax.f32 %v162, %v195
    %v213 = vmax.f32 %v163, %v197
    %vm214 = vcmask 1045504
    %v215 = vrot.slane %v153, 2
    %v216 = vrot.slane %v154, 2
    %v217 = vsel %vm214, %v215, %v216
    %v218 = vrot.slane %v155, 2
    %v219 = vsel %vm214, %v216, %v218
    %v220 = vrot.slane %v156, 2
    %v221 = vrot.slane %v157, 2
    %v222 = vsel %vm214, %v220, %v221
    %v223 = vrot.slane %v158, 2
    %v224 = vsel %vm214, %v221, %v223
    %v225 = vrot.slane %v159, 2
    %v226 = vrot.slane %v160, 2
    %v227 = vsel %vm214, %v225, %v226
    %v228 = vrot.slane %v161, 2
    %v229 = vsel %vm214, %v226, %v228
    %v230 = vrot.slane %v162, 2
    %v231 = vrot.slane %v163, 2
    %v232 = vsel %vm214, %v230, %v231
    %v233 = vrot.slane %v164, 2
    %v234 = vsel %vm214, %v231, %v233
    %v243 = vmax.f32 %v206, %v217
    %v244 = vmax.f32 %v207, %v219
    %v245 = vmax.f32 %v208, %v222
    %v246 = vmax.f32 %v209, %v224
    %v247 = vmax.f32 %v210, %v227
    %v248 = vmax.f32 %v211, %v229
    %v249 = vmax.f32 %v212, %v232
    %v250 = vmax.f32 %v213, %v234
    %v251 = vsub.f32 1.0, %v243
    %v252 = vsub.f32 1.0, %v244
    %v253 = vsub.f32 1.0, %v245
    %v254 = vsub.f32 1.0, %v246
    %v255 = vsub.f32 1.0, %v247
    %v256 = vsub.f32 1.0, %v248
    %v257 = vsub.f32 1.0, %v249
    %v258 = vsub.f32 1.0, %v250
    %vm259 = vcmask 130048
    %260 = vst.msk [vmem:[#allocation2] sm:$0xff] %vm259, %v251
    %261 = vst.msk [vmem:[#allocation2 + $0x8] sm:$0xff] %vm259, %v252
    %262 = vst.msk [vmem:[#allocation2 + $0x10] sm:$0xff] %vm259, %v253
    %263 = vst.msk [vmem:[#allocation2 + $0x18] sm:$0xff] %vm259, %v254
    %264 = vst.msk [vmem:[#allocation2 + $0x20] sm:$0xff] %vm259, %v255
    %265 = vst.msk [vmem:[#allocation2 + $0x28] sm:$0xff] %vm259, %v256
    %266 = vst.msk [vmem:[#allocation2 + $0x30] sm:$0xff] %vm259, %v257
    %267 = vst.msk [vmem:[#allocation2 + $0x38] sm:$0xff] %vm259, %v258
    // Predicated region
    $region6: #{tpu_custom_call.1} parent=1 // pred_check
      _
    $region7: #{tpu_custom_call.1} parent=1 // pred_check_branch
      %269 = sbr.rel (0) target = $region9
    $region8: #{tpu_custom_call.1} parent=1 // pred_region
      %271 = vsyncadd [#allocation3], 0
      %s272 = sshll.u32 [#allocation2], 4
      %s273 = int_to_ptr.vmem [resolvable:$true] %s272
      %s274 = sshll.u32 %s1, 4
      %s275 = int_to_ptr.hbm [resolvable:$true] %s274
      %280 = dma.vmem_to_hbm [thread:$0]  %s273, 1024, %s275, [#allocation3], 128, 128, 8
    $region9: #{tpu_custom_call.1} parent=1 // pred_fallthru
      _
    // Predicated region
    $region10: #{tpu_custom_call.1} parent=1 // pred_check
      _
    $region11: #{tpu_custom_call.1} parent=1 // pred_check_branch
      %282 = sbr.rel (0) target = $region13
    $region12: #{tpu_custom_call.1} parent=1 // pred_region
      %284 = dma.done [#allocation3], 1024
    $region13: #{tpu_custom_call.1} parent=1 // pred_fallthru
      _
    %285 = vsyncpa [#allocation3], 1

</llo_original>
